<compile_context>
chip_gen: v5e
topology: v5e:2x2
jax: 0.10.0
libtpu: 0.0.40
codegen_flags: <defaults>
</compile_context>

<pallas_src>
import jax
import jax.numpy as jnp
from jax.experimental import pallas as pl
from jax.experimental.pallas import tpu as pltpu

EPS = 1e-5                 # nn.BatchNorm2d default eps
_VPU_PRODUCT_MAX = 128     # (C1+C2)*Cout at/below this -> VPU conv, else MXU
_ABS_TILE_CAP = 8192       # absolute lane-width cap for a spatial tile


def _vmem_budget_bytes():
    """~75% of this chip's VMEM (128 MiB v5e/v6e, 64 MiB v7x); safe fallback."""
    try:
        cap = int(pltpu.get_tpu_info().vmem_capacity_bytes)
    except Exception:  # interpret mode / older runtimes
        cap = 64 * 1024 * 1024
    return (cap * 3) // 4


def _derive_tile(hw, c1, c2, cout, in_itemsize, vmem_budget, max_tile=None):
    """Channel-aware spatial tile width (lanes); multiple of 128 when tiled."""
    # Live VMEM per lane: double-buffered x1/x2 inputs and output, plus f32
    # working copies / conv accumulator inside the kernel body.
    bytes_per_lane = 2 * in_itemsize * (c1 + c2 + cout) + 4 * (c1 + c2 + cout)
    cap = (vmem_budget // 2) // max(bytes_per_lane, 1)     # 2x extra headroom
    cap = min(max(cap, 128), _ABS_TILE_CAP)
    if max_tile is not None:
        cap = min(cap, max(max_tile, 128))
    if hw <= cap:
        return hw                      # one full-row block (always legal)
    return (cap // 128) * 128          # ragged tail handled by masking / cdiv


def _conv1x1(x1, x2, w1, w2, use_vpu):
    """Channels-first 1x1 conv: (Cout,C1)@(C1,TR)+(Cout,C2)@(C2,TR), f32 acc."""
    if use_vpu:
        # Tiny channel counts: broadcast FMAs on the VPU keep the MXU path and
        # its result-FIFO latency out of an almost-empty matmul.
        cout = w1.shape[0]
        tr = x1.shape[1]
        acc = jnp.zeros((cout, tr), dtype=jnp.float32)
        for c in range(w1.shape[1]):
            acc = acc + (w1[:, c:c + 1].astype(jnp.float32) *
                         x1[c:c + 1, :].astype(jnp.float32))
        for c in range(w2.shape[1]):
            acc = acc + (w2[:, c:c + 1].astype(jnp.float32) *
                         x2[c:c + 1, :].astype(jnp.float32))
        return acc
    return (jnp.dot(w1, x1, preferred_element_type=jnp.float32) +
            jnp.dot(w2, x2, preferred_element_type=jnp.float32))


def fusion_block(x1, x2, conv_w, conv_b, bn_gamma, bn_beta, *, max_tile=None):
    """x1: (N, C1, H, W), x2: (N, C2, H, W) -> (N, Cout, H, W), NCHW in/out."""
    del conv_b  # dead compute: training-mode BN's mean subtraction cancels it
    N, C1, H, W = x1.shape
    C2 = x2.shape[1]
    Cout = conv_w.shape[0]
    HW = H * W

    # Free reshapes (no HBM traffic): channels on sublanes, spatial lane-dense.
    x1r = x1.reshape(N, C1, HW)
    x2r = x2.reshape(N, C2, HW)

    # Split the 1x1 conv weight so the channel concat never materializes.
    w = conv_w.reshape(Cout, C1 + C2).astype(x1.dtype)
    w1 = w[:, :C1]
    w2 = w[:, C1:]

    vmem_budget = _vmem_budget_bytes()
    itemsize = jnp.dtype(x1.dtype).itemsize
    TR = _derive_tile(HW, C1, C2, Cout, itemsize, vmem_budget, max_tile)
    n_rt = pl.cdiv(HW, TR)
    needs_mask = (HW % TR) != 0
    use_vpu = (C1 + C2) * Cout <= _VPU_PRODUCT_MAX

    # Split the stats reduction into 2 "parallel" chunks when the batch alone
    # cannot feed both TensorCores (v7x megacore); harmless on 1-TC chips.
    n_chunks = 2 if (N == 1 and n_rt >= 2 and n_rt % 2 == 0) else 1
    rpc = n_rt // n_chunks            # reduction steps per chunk

    # ---- pass 1: Gram-block / per-channel-sum statistics --------------------
    def stats_kernel(x1_ref, x2_ref, g11_ref, g12_ref, g22_ref, s1_ref, s2_ref):
        rt = pl.program_id(2)

        @pl.when(rt == 0)
        def _init():
            g11_ref[...] = jnp.zeros_like(g11_ref)
            g12_ref[...] = jnp.zeros_like(g12_ref)
            g22_ref[...] = jnp.zeros_like(g22_ref)
            s1_ref[...] = jnp.zeros_like(s1_ref)
            s2_ref[...] = jnp.zeros_like(s2_ref)

        xa = x1_ref[...].astype(jnp.float32)             # (C1, TR)
        xb = x2_ref[...].astype(jnp.float32)             # (C2, TR)
        if needs_mask:
            start = (pl.program_id(1) * rpc + rt) * TR
            lane = jax.lax.broadcasted_iota(jnp.int32, (1, TR), 1)
            valid = (start + lane) < HW
            xa = jnp.where(valid, xa, 0.0)
            xb = jnp.where(valid, xb, 0.0)

        dn = (((1,), (1,)), ((), ()))                    # contract lane axes
        g11_ref[...] += jax.lax.dot_general(
            xa, xa, dn, preferred_element_type=jnp.float32)
        g12_ref[...] += jax.lax.dot_general(
            xa, xb, dn, preferred_element_type=jnp.float32)
        g22_ref[...] += jax.lax.dot_general(
            xb, xb, dn, preferred_element_type=jnp.float32)
        s1_ref[...] += jnp.sum(xa, axis=1, keepdims=True)
        s2_ref[...] += jnp.sum(xb, axis=1, keepdims=True)

    stat_shapes = (
        jax.ShapeDtypeStruct((N, n_chunks, C1, C1), jnp.float32),
        jax.ShapeDtypeStruct((N, n_chunks, C1, C2), jnp.float32),
        jax.ShapeDtypeStruct((N, n_chunks, C2, C2), jnp.float32),
        jax.ShapeDtypeStruct((N, n_chunks, C1, 1), jnp.float32),
        jax.ShapeDtypeStruct((N, n_chunks, C2, 1), jnp.float32),
    )
    stat_specs = tuple(
        pl.BlockSpec((None, None) + s.shape[2:], lambda n, c, rt: (n, c, 0, 0))
        for s in stat_shapes
    )

    g11p, g12p, g22p, s1p, s2p = pl.pallas_call(
        stats_kernel,
        out_shape=stat_shapes,
        grid_spec=pltpu.PrefetchScalarGridSpec(
            num_scalar_prefetch=0,
            grid=(N, n_chunks, rpc),
            in_specs=[
                pl.BlockSpec((None, C1, TR), lambda n, c, rt: (n, 0, c * rpc + rt)),
                pl.BlockSpec((None, C2, TR), lambda n, c, rt: (n, 0, c * rpc + rt)),
            ],
            out_specs=stat_specs,
        ),
        compiler_params=pltpu.CompilerParams(
            dimension_semantics=("parallel", "parallel", "arbitrary"),
            vmem_limit_bytes=vmem_budget,
        ),
    )(x1r, x2r)

    # Fold partial sums and precompute per-channel scale/shift ONCE (not per tile).
    g11 = jnp.sum(g11p, axis=(0, 1))                     # (C1, C1)
    g12 = jnp.sum(g12p, axis=(0, 1))                     # (C1, C2)
    g22 = jnp.sum(g22p, axis=(0, 1))                     # (C2, C2)
    s1 = jnp.sum(s1p, axis=(0, 1))                       # (C1, 1)
    s2 = jnp.sum(s2p, axis=(0, 1))                       # (C2, 1)

    w1f = w1.astype(jnp.float32)
    w2f = w2.astype(jnp.float32)
    r = jnp.float32(N * HW)
    sums = (w1f @ s1 + w2f @ s2)[:, 0]                   # sum_spatial(y), (Cout,)
    sumsq = (jnp.sum((w1f @ g11) * w1f, axis=1)          # diag(W G W^T), (Cout,)
             + 2.0 * jnp.sum((w1f @ g12) * w2f, axis=1)
             + jnp.sum((w2f @ g22) * w2f, axis=1))
    mean = sums / r
    var = jnp.maximum(sumsq / r - mean * mean, 0.0)      # biased var, clamped
    inv_std = jax.lax.rsqrt(var + EPS)
    scale = bn_gamma.astype(jnp.float32) * inv_std
    shift = bn_beta.astype(jnp.float32) - mean * scale
    scale2d = scale.reshape(Cout, 1)
    shift2d = shift.reshape(Cout, 1)

    # ---- pass 2: conv + scale/shift + ReLU, written directly in NCHW --------
    def apply_kernel(x1_ref, x2_ref, w1_ref, w2_ref, sc_ref, sh_ref, o_ref):
        y = _conv1x1(x1_ref[...], x2_ref[...], w1_ref[...], w2_ref[...], use_vpu)
        out = jnp.maximum(y * sc_ref[...] + sh_ref[...], 0.0)
        o_ref[...] = out.astype(o_ref.dtype)

    out3d = pl.pallas_call(
        apply_kernel,
        out_shape=jax.ShapeDtypeStruct((N, Cout, HW), x1.dtype),
        grid_spec=pltpu.PrefetchScalarGridSpec(
            num_scalar_prefetch=0,
            grid=(N, n_rt),
            in_specs=[
                pl.BlockSpec((None, C1, TR), lambda n, rt: (n, 0, rt)),
                pl.BlockSpec((None, C2, TR), lambda n, rt: (n, 0, rt)),
                pl.BlockSpec((Cout, C1), lambda n, rt: (0, 0)),
                pl.BlockSpec((Cout, C2), lambda n, rt: (0, 0)),
                pl.BlockSpec((Cout, 1), lambda n, rt: (0, 0)),
                pl.BlockSpec((Cout, 1), lambda n, rt: (0, 0)),
            ],
            out_specs=pl.BlockSpec((None, Cout, TR), lambda n, rt: (n, 0, rt)),
        ),
        compiler_params=pltpu.CompilerParams(
            dimension_semantics=("parallel", "parallel"),
            vmem_limit_bytes=vmem_budget,
        ),
    )(x1r, x2r, w1, w2, scale2d, shift2d)

    return out3d.reshape(N, Cout, H, W)


def _reference(x1, x2, conv_w, conv_b, bn_gamma, bn_beta):
    # Pure-JAX reference with the SAME semantics as the torch module (training-
    # mode BN).  Keeps the conv bias, demonstrating that dropping it in the
    # kernel is mathematically a no-op.
    x = jnp.concatenate([x1, x2], axis=1)                       # (N, Cin, H, W)
    w = conv_w.reshape(conv_w.shape[0], -1)                     # (Cout, Cin)
    y = jnp.einsum("nchw,oc->nohw", x, w) + conv_b[None, :, None, None]
    mean = jnp.mean(y, axis=(0, 2, 3), keepdims=True)
    var = jnp.mean((y - mean) ** 2, axis=(0, 2, 3), keepdims=True)
    y = (y - mean) / jnp.sqrt(var + EPS)
    y = y * bn_gamma[None, :, None, None] + bn_beta[None, :, None, None]
    return jnp.maximum(y, 0.0)


if __name__ == "__main__":
    key = jax.random.PRNGKey(0)

    def run_case(k, n, c1, c2, cout, h, w, max_tile=None, name=""):
        k1, k2, kw, kb, kg, kbe = jax.random.split(k, 6)
        x1 = jax.random.normal(k1, (n, c1, h, w), dtype=jnp.float32)
        x2 = jax.random.normal(k2, (n, c2, h, w), dtype=jnp.float32)
        conv_w = jax.random.normal(kw, (cout, c1 + c2, 1, 1), jnp.float32) * 0.1
        conv_b = jax.random.normal(kb, (cout,), jnp.float32) * 0.1
        gamma = 1.0 + 0.1 * jax.random.normal(kg, (cout,), jnp.float32)
        beta = 0.1 * jax.random.normal(kbe, (cout,), jnp.float32)

        out = jax.block_until_ready(
            fusion_block(x1, x2, conv_w, conv_b, gamma, beta, max_tile=max_tile))
        ref = _reference(x1, x2, conv_w, conv_b, gamma, beta)
        assert out.shape == (n, cout, h, w)
        assert jnp.allclose(out, ref, atol=1e-4, rtol=1e-4), \
            f"mismatch vs JAX reference ({name})"

    k0, k1 = jax.random.split(key)
    # Main demo: module-consistent small shapes (VPU conv path, full-row tile).
    run_case(k0, n=2, c1=4, c2=4, cout=8, h=16, w=16, name="demo")
    # Robustness: ragged spatial tail (masked stats), chunked stats reduction
    # for N=1, MXU conv path, partial output stores.
    run_case(k1, n=1, c1=3, c2=5, cout=32, h=20, w=20, max_tile=128, name="ragged")

    print("KERNEL_OK")
</pallas_src>

<mosaic_0001>
module attributes {stable_mosaic.version = 11 : i64} {
  func.func @stats_kernel(%arg0: i32, %arg1: i32, %arg2: i32, %arg3: memref<1x4x256xf32, #tpu.memory_space<vmem>>, %arg4: memref<1x4x256xf32, #tpu.memory_space<vmem>>, %arg5: memref<1x1x4x4xf32, #tpu.memory_space<vmem>>, %arg6: memref<1x1x4x4xf32, #tpu.memory_space<vmem>>, %arg7: memref<1x1x4x4xf32, #tpu.memory_space<vmem>>, %arg8: memref<1x1x4x1xf32, #tpu.memory_space<vmem>>, %arg9: memref<1x1x4x1xf32, #tpu.memory_space<vmem>>) attributes {dimension_semantics = [#tpu.dimension_semantics<parallel>, #tpu.dimension_semantics<parallel>, #tpu.dimension_semantics<arbitrary>], iteration_bounds = array<i64: 2, 1, 1>, scalar_prefetch = 0 : i64, scratch_operands = 0 : i64, tpu.core_type = #tpu.core_type<tc>, window_params = [{transform_indices = @transform_0, window_bounds = array<i64: 1, 4, 256>}, {transform_indices = @transform_1, window_bounds = array<i64: 1, 4, 256>}, {transform_indices = @transform_2, window_bounds = array<i64: 1, 1, 4, 4>}, {transform_indices = @transform_3, window_bounds = array<i64: 1, 1, 4, 4>}, {transform_indices = @transform_4, window_bounds = array<i64: 1, 1, 4, 4>}, {transform_indices = @transform_5, window_bounds = array<i64: 1, 1, 4, 1>}, {transform_indices = @transform_6, window_bounds = array<i64: 1, 1, 4, 1>}]} {
    %c0_i32 = arith.constant 0 : i32
    %0 = arith.cmpi eq, %arg2, %c0_i32 : i32
    %1 = arith.extui %0 : i1 to i32
    %c0_i32_0 = arith.constant 0 : i32
    %2 = arith.cmpi ne, %1, %c0_i32_0 : i32
    scf.if %2 {
      %cst_50 = arith.constant 0.000000e+00 : f32
      %44 = vector.broadcast %cst_50 : f32 to vector<4x4xf32>
      %c0_51 = arith.constant 0 : index
      %c0_52 = arith.constant 0 : index
      %c0_53 = arith.constant 0 : index
      %c0_54 = arith.constant 0 : index
      %45 = vector.load %arg5[%c0_51, %c0_52, %c0_53, %c0_54] : memref<1x1x4x4xf32, #tpu.memory_space<vmem>>, vector<1x1x4x4xf32>
      %46 = vector.shape_cast %45 : vector<1x1x4x4xf32> to vector<4x4xf32>
      %47 = vector.shape_cast %44 : vector<4x4xf32> to vector<1x1x4x4xf32>
      tpu.vector_store %arg5[%c0_51, %c0_52, %c0_53, %c0_54], %47 {strides = array<i32>} : memref<1x1x4x4xf32, #tpu.memory_space<vmem>>, vector<1x1x4x4xf32>,
      %cst_55 = arith.constant 0.000000e+00 : f32
      %48 = vector.broadcast %cst_55 : f32 to vector<4x4xf32>
      %c0_56 = arith.constant 0 : index
      %c0_57 = arith.constant 0 : index
      %c0_58 = arith.constant 0 : index
      %c0_59 = arith.constant 0 : index
      %49 = vector.load %arg6[%c0_56, %c0_57, %c0_58, %c0_59] : memref<1x1x4x4xf32, #tpu.memory_space<vmem>>, vector<1x1x4x4xf32>
      %50 = vector.shape_cast %49 : vector<1x1x4x4xf32> to vector<4x4xf32>
      %51 = vector.shape_cast %48 : vector<4x4xf32> to vector<1x1x4x4xf32>
      tpu.vector_store %arg6[%c0_56, %c0_57, %c0_58, %c0_59], %51 {strides = array<i32>} : memref<1x1x4x4xf32, #tpu.memory_space<vmem>>, vector<1x1x4x4xf32>,
      %cst_60 = arith.constant 0.000000e+00 : f32
      %52 = vector.broadcast %cst_60 : f32 to vector<4x4xf32>
      %c0_61 = arith.constant 0 : index
      %c0_62 = arith.constant 0 : index
      %c0_63 = arith.constant 0 : index
      %c0_64 = arith.constant 0 : index
      %53 = vector.load %arg7[%c0_61, %c0_62, %c0_63, %c0_64] : memref<1x1x4x4xf32, #tpu.memory_space<vmem>>, vector<1x1x4x4xf32>
      %54 = vector.shape_cast %53 : vector<1x1x4x4xf32> to vector<4x4xf32>
      %55 = vector.shape_cast %52 : vector<4x4xf32> to vector<1x1x4x4xf32>
      tpu.vector_store %arg7[%c0_61, %c0_62, %c0_63, %c0_64], %55 {strides = array<i32>} : memref<1x1x4x4xf32, #tpu.memory_space<vmem>>, vector<1x1x4x4xf32>,
      %cst_65 = arith.constant 0.000000e+00 : f32
      %56 = vector.broadcast %cst_65 : f32 to vector<4x1xf32>
      %c0_66 = arith.constant 0 : index
      %c0_67 = arith.constant 0 : index
      %c0_68 = arith.constant 0 : index
      %c0_69 = arith.constant 0 : index
      %57 = vector.load %arg8[%c0_66, %c0_67, %c0_68, %c0_69] : memref<1x1x4x1xf32, #tpu.memory_space<vmem>>, vector<1x1x4x1xf32>
      %58 = vector.shape_cast %57 : vector<1x1x4x1xf32> to vector<4x1xf32>
      %59 = vector.shape_cast %56 : vector<4x1xf32> to vector<1x1x4x1xf32>
      tpu.vector_store %arg8[%c0_66, %c0_67, %c0_68, %c0_69], %59 {strides = array<i32>} : memref<1x1x4x1xf32, #tpu.memory_space<vmem>>, vector<1x1x4x1xf32>,
      %cst_70 = arith.constant 0.000000e+00 : f32
      %60 = vector.broadcast %cst_70 : f32 to vector<4x1xf32>
      %c0_71 = arith.constant 0 : index
      %c0_72 = arith.constant 0 : index
      %c0_73 = arith.constant 0 : index
      %c0_74 = arith.constant 0 : index
      %61 = vector.load %arg9[%c0_71, %c0_72, %c0_73, %c0_74] : memref<1x1x4x1xf32, #tpu.memory_space<vmem>>, vector<1x1x4x1xf32>
      %62 = vector.shape_cast %61 : vector<1x1x4x1xf32> to vector<4x1xf32>
      %63 = vector.shape_cast %60 : vector<4x1xf32> to vector<1x1x4x1xf32>
      tpu.vector_store %arg9[%c0_71, %c0_72, %c0_73, %c0_74], %63 {strides = array<i32>} : memref<1x1x4x1xf32, #tpu.memory_space<vmem>>, vector<1x1x4x1xf32>,
    } else {
    }
    %c0 = arith.constant 0 : index
    %c0_1 = arith.constant 0 : index
    %c0_2 = arith.constant 0 : index
    %3 = vector.load %arg3[%c0, %c0_1, %c0_2] : memref<1x4x256xf32, #tpu.memory_space<vmem>>, vector<1x4x256xf32>
    %4 = vector.shape_cast %3 : vector<1x4x256xf32> to vector<4x256xf32>
    %c0_3 = arith.constant 0 : index
    %c0_4 = arith.constant 0 : index
    %c0_5 = arith.constant 0 : index
    %5 = vector.load %arg4[%c0_3, %c0_4, %c0_5] : memref<1x4x256xf32, #tpu.memory_space<vmem>>, vector<1x4x256xf32>
    %6 = vector.shape_cast %5 : vector<1x4x256xf32> to vector<4x256xf32>
    %c0_6 = arith.constant 0 : index
    %c0_7 = arith.constant 0 : index
    %c0_8 = arith.constant 0 : index
    %c0_9 = arith.constant 0 : index
    %7 = vector.load %arg5[%c0_6, %c0_7, %c0_8, %c0_9] : memref<1x1x4x4xf32, #tpu.memory_space<vmem>>, vector<1x1x4x4xf32>
    %8 = vector.shape_cast %7 : vector<1x1x4x4xf32> to vector<4x4xf32>
    %cst = arith.constant dense<0.000000e+00> : vector<4x4xf32>
    %9 = tpu.matmul %4, %4, %cst {dimension_numbers = #tpu.dot_dimension_numbers<[1], [1], [0], [0], [0, 0, 1, 0], [], []>} : vector<4x256xf32>, vector<4x256xf32>, vector<4x4xf32> -> vector<4x4xf32>
    %10 = arith.addf %8, %9 : vector<4x4xf32>
    %c0_10 = arith.constant 0 : index
    %c0_11 = arith.constant 0 : index
    %c0_12 = arith.constant 0 : index
    %c0_13 = arith.constant 0 : index
    %11 = vector.load %arg5[%c0_10, %c0_11, %c0_12, %c0_13] : memref<1x1x4x4xf32, #tpu.memory_space<vmem>>, vector<1x1x4x4xf32>
    %12 = vector.shape_cast %11 : vector<1x1x4x4xf32> to vector<4x4xf32>
    %13 = vector.shape_cast %10 : vector<4x4xf32> to vector<1x1x4x4xf32>
    tpu.vector_store %arg5[%c0_10, %c0_11, %c0_12, %c0_13], %13 {strides = array<i32>} : memref<1x1x4x4xf32, #tpu.memory_space<vmem>>, vector<1x1x4x4xf32>,
    %c0_14 = arith.constant 0 : index
    %c0_15 = arith.constant 0 : index
    %c0_16 = arith.constant 0 : index
    %c0_17 = arith.constant 0 : index
    %14 = vector.load %arg6[%c0_14, %c0_15, %c0_16, %c0_17] : memref<1x1x4x4xf32, #tpu.memory_space<vmem>>, vector<1x1x4x4xf32>
    %15 = vector.shape_cast %14 : vector<1x1x4x4xf32> to vector<4x4xf32>
    %cst_18 = arith.constant dense<0.000000e+00> : vector<4x4xf32>
    %16 = tpu.matmul %4, %6, %cst_18 {dimension_numbers = #tpu.dot_dimension_numbers<[1], [1], [0], [0], [0, 0, 1, 0], [], []>} : vector<4x256xf32>, vector<4x256xf32>, vector<4x4xf32> -> vector<4x4xf32>
    %17 = arith.addf %15, %16 : vector<4x4xf32>
    %c0_19 = arith.constant 0 : index
    %c0_20 = arith.constant 0 : index
    %c0_21 = arith.constant 0 : index
    %c0_22 = arith.constant 0 : index
    %18 = vector.load %arg6[%c0_19, %c0_20, %c0_21, %c0_22] : memref<1x1x4x4xf32, #tpu.memory_space<vmem>>, vector<1x1x4x4xf32>
    %19 = vector.shape_cast %18 : vector<1x1x4x4xf32> to vector<4x4xf32>
    %20 = vector.shape_cast %17 : vector<4x4xf32> to vector<1x1x4x4xf32>
    tpu.vector_store %arg6[%c0_19, %c0_20, %c0_21, %c0_22], %20 {strides = array<i32>} : memref<1x1x4x4xf32, #tpu.memory_space<vmem>>, vector<1x1x4x4xf32>,
    %c0_23 = arith.constant 0 : index
    %c0_24 = arith.constant 0 : index
    %c0_25 = arith.constant 0 : index
    %c0_26 = arith.constant 0 : index
    %21 = vector.load %arg7[%c0_23, %c0_24, %c0_25, %c0_26] : memref<1x1x4x4xf32, #tpu.memory_space<vmem>>, vector<1x1x4x4xf32>
    %22 = vector.shape_cast %21 : vector<1x1x4x4xf32> to vector<4x4xf32>
    %cst_27 = arith.constant dense<0.000000e+00> : vector<4x4xf32>
    %23 = tpu.matmul %6, %6, %cst_27 {dimension_numbers = #tpu.dot_dimension_numbers<[1], [1], [0], [0], [0, 0, 1, 0], [], []>} : vector<4x256xf32>, vector<4x256xf32>, vector<4x4xf32> -> vector<4x4xf32>
    %24 = arith.addf %22, %23 : vector<4x4xf32>
    %c0_28 = arith.constant 0 : index
    %c0_29 = arith.constant 0 : index
    %c0_30 = arith.constant 0 : index
    %c0_31 = arith.constant 0 : index
    %25 = vector.load %arg7[%c0_28, %c0_29, %c0_30, %c0_31] : memref<1x1x4x4xf32, #tpu.memory_space<vmem>>, vector<1x1x4x4xf32>
    %26 = vector.shape_cast %25 : vector<1x1x4x4xf32> to vector<4x4xf32>
    %27 = vector.shape_cast %24 : vector<4x4xf32> to vector<1x1x4x4xf32>
    tpu.vector_store %arg7[%c0_28, %c0_29, %c0_30, %c0_31], %27 {strides = array<i32>} : memref<1x1x4x4xf32, #tpu.memory_space<vmem>>, vector<1x1x4x4xf32>,
    %c0_32 = arith.constant 0 : index
    %c0_33 = arith.constant 0 : index
    %c0_34 = arith.constant 0 : index
    %c0_35 = arith.constant 0 : index
    %28 = vector.load %arg8[%c0_32, %c0_33, %c0_34, %c0_35] : memref<1x1x4x1xf32, #tpu.memory_space<vmem>>, vector<1x1x4x1xf32>
    %29 = vector.shape_cast %28 : vector<1x1x4x1xf32> to vector<4x1xf32>
    %cst_36 = arith.constant dense<0.000000e+00> : vector<4xf32>
    %30 = vector.multi_reduction <add>, %4, %cst_36 [1] : vector<4x256xf32> to vector<4xf32>
    %31 = vector.shape_cast %30 : vector<4xf32> to vector<4x1xf32>
    %32 = arith.addf %29, %31 : vector<4x1xf32>
    %c0_37 = arith.constant 0 : index
    %c0_38 = arith.constant 0 : index
    %c0_39 = arith.constant 0 : index
    %c0_40 = arith.constant 0 : index
    %33 = vector.load %arg8[%c0_37, %c0_38, %c0_39, %c0_40] : memref<1x1x4x1xf32, #tpu.memory_space<vmem>>, vector<1x1x4x1xf32>
    %34 = vector.shape_cast %33 : vector<1x1x4x1xf32> to vector<4x1xf32>
    %35 = vector.shape_cast %32 : vector<4x1xf32> to vector<1x1x4x1xf32>
    tpu.vector_store %arg8[%c0_37, %c0_38, %c0_39, %c0_40], %35 {strides = array<i32>} : memref<1x1x4x1xf32, #tpu.memory_space<vmem>>, vector<1x1x4x1xf32>,
    %c0_41 = arith.constant 0 : index
    %c0_42 = arith.constant 0 : index
    %c0_43 = arith.constant 0 : index
    %c0_44 = arith.constant 0 : index
    %36 = vector.load %arg9[%c0_41, %c0_42, %c0_43, %c0_44] : memref<1x1x4x1xf32, #tpu.memory_space<vmem>>, vector<1x1x4x1xf32>
    %37 = vector.shape_cast %36 : vector<1x1x4x1xf32> to vector<4x1xf32>
    %cst_45 = arith.constant dense<0.000000e+00> : vector<4xf32>
    %38 = vector.multi_reduction <add>, %6, %cst_45 [1] : vector<4x256xf32> to vector<4xf32>
    %39 = vector.shape_cast %38 : vector<4xf32> to vector<4x1xf32>
    %40 = arith.addf %37, %39 : vector<4x1xf32>
    %c0_46 = arith.constant 0 : index
    %c0_47 = arith.constant 0 : index
    %c0_48 = arith.constant 0 : index
    %c0_49 = arith.constant 0 : index
    %41 = vector.load %arg9[%c0_46, %c0_47, %c0_48, %c0_49] : memref<1x1x4x1xf32, #tpu.memory_space<vmem>>, vector<1x1x4x1xf32>
    %42 = vector.shape_cast %41 : vector<1x1x4x1xf32> to vector<4x1xf32>
    %43 = vector.shape_cast %40 : vector<4x1xf32> to vector<1x1x4x1xf32>
    tpu.vector_store %arg9[%c0_46, %c0_47, %c0_48, %c0_49], %43 {strides = array<i32>} : memref<1x1x4x1xf32, #tpu.memory_space<vmem>>, vector<1x1x4x1xf32>,
    return
  }
  func.func @transform_0(%arg0: i32, %arg1: i32, %arg2: i32) -> (i32, i32, i32) {
    %c1_i32 = arith.constant 1 : i32
    %0 = arith.muli %arg1, %c1_i32 : i32
    %1 = arith.addi %0, %arg2 : i32
    %c0_i32 = arith.constant 0 : i32
    %c0_i32_0 = arith.constant 0 : i32
    return %arg0, %c0_i32, %1 : i32, i32, i32
  }
  func.func @transform_1(%arg0: i32, %arg1: i32, %arg2: i32) -> (i32, i32, i32) {
    %c1_i32 = arith.constant 1 : i32
    %0 = arith.muli %arg1, %c1_i32 : i32
    %1 = arith.addi %0, %arg2 : i32
    %c0_i32 = arith.constant 0 : i32
    %c0_i32_0 = arith.constant 0 : i32
    return %arg0, %c0_i32, %1 : i32, i32, i32
  }
  func.func @transform_2(%arg0: i32, %arg1: i32, %arg2: i32) -> (i32, i32, i32, i32) {
    %c0_i32 = arith.constant 0 : i32
    %c0_i32_0 = arith.constant 0 : i32
    %c0_i32_1 = arith.constant 0 : i32
    return %arg0, %arg1, %c0_i32, %c0_i32_0 : i32, i32, i32, i32
  }
  func.func @transform_3(%arg0: i32, %arg1: i32, %arg2: i32) -> (i32, i32, i32, i32) {
    %c0_i32 = arith.constant 0 : i32
    %c0_i32_0 = arith.constant 0 : i32
    %c0_i32_1 = arith.constant 0 : i32
    return %arg0, %arg1, %c0_i32, %c0_i32_0 : i32, i32, i32, i32
  }
  func.func @transform_4(%arg0: i32, %arg1: i32, %arg2: i32) -> (i32, i32, i32, i32) {
    %c0_i32 = arith.constant 0 : i32
    %c0_i32_0 = arith.constant 0 : i32
    %c0_i32_1 = arith.constant 0 : i32
    return %arg0, %arg1, %c0_i32, %c0_i32_0 : i32, i32, i32, i32
  }
  func.func @transform_5(%arg0: i32, %arg1: i32, %arg2: i32) -> (i32, i32, i32, i32) {
    %c0_i32 = arith.constant 0 : i32
    %c0_i32_0 = arith.constant 0 : i32
    %c0_i32_1 = arith.constant 0 : i32
    return %arg0, %arg1, %c0_i32, %c0_i32_0 : i32, i32, i32, i32
  }
  func.func @transform_6(%arg0: i32, %arg1: i32, %arg2: i32) -> (i32, i32, i32, i32) {
    %c0_i32 = arith.constant 0 : i32
    %c0_i32_0 = arith.constant 0 : i32
    %c0_i32_1 = arith.constant 0 : i32
    return %arg0, %arg1, %c0_i32, %c0_i32_0 : i32, i32, i32, i32
  }
}

</mosaic_0001>

<llo_original>
// kernel: tpu_custom_call.1
$region0: #{tpu_custom_call.1}
  #allocation0 [shape = 'u32[]', space=smem, size = 0x4, offset = 0x4, fixed_abs, tag = 'smem constant byte address 0x4 - core index']
  #allocation1 [shape = 'u32[72,128]{1,0:T(1,128)}', space=vmem, size = 0x9000, scoped, tag = 'internal scratch']
  %s0 = inlined_call_operand.hbm [shape: f32[2,4,256], index: 0, kind: input, shape index: {}]
  %s1 = inlined_call_operand.hbm [shape: f32[2,4,256], index: 1, kind: input, shape index: {}]
  %s2 = inlined_call_operand.hbm [shape: f32[2,1,4,4], index: 2, kind: output, shape index: {0}]
  %s3 = inlined_call_operand.hbm [shape: f32[2,1,4,4], index: 3, kind: output, shape index: {1}]
  %s4 = inlined_call_operand.hbm [shape: f32[2,1,4,4], index: 4, kind: output, shape index: {2}]
  %s5 = inlined_call_operand.vmem [shape: f32[2,1,4,1], index: 5, kind: output, shape index: {3}]
  %s6 = inlined_call_operand.vmem [shape: f32[2,1,4,1], index: 6, kind: output, shape index: {4}]
  %7 = xla_tuple %s2, %s3, %s4, %s5, %s6
  %s8 = sld [smem:[#allocation0]]
  $region85: #{tpu_custom_call.1} parent=0
    _
  %s10 = ssub.s32 1, %s8
  %s11 = scalar_select 0, %s10, %s8
  $region1: #{tpu_custom_call.1} parent=0
    #allocation2 [shape = 'u8[8192]{0}', space=vmem, size = 0x2000, scoped, tag = 'input window, operand 0']
    #allocation3 [shape = 's32[2]{0}', space=sflag, size = 0x8, scoped, tag = 'scoped memory for tpu_custom_call.1']
    #allocation4 [shape = 's32[2]{0}', space=sflag, size = 0x8, scoped, tag = 'scoped memory for tpu_custom_call.1']
    #allocation5 [shape = 'u8[8192]{0}', space=vmem, size = 0x2000, scoped, tag = 'input window, operand 1']
    #allocation6 [shape = 's32[2]{0}', space=sflag, size = 0x8, scoped, tag = 'scoped memory for tpu_custom_call.1']
    #allocation7 [shape = 'u8[4096]{0}', space=vmem, size = 0x1000, scoped, tag = 'output window, operand 0']
    #allocation8 [shape = 'u8[4096]{0}', space=vmem, size = 0x1000, scoped, tag = 'output window, operand 1']
    #allocation9 [shape = 's32[2]{0}', space=sflag, size = 0x8, scoped, tag = 'scoped memory for tpu_custom_call.1']
    #allocation10 [shape = 'u8[4096]{0}', space=vmem, size = 0x1000, scoped, tag = 'output window, operand 2']
    %12 = vsyncpa [#allocation3], 0
    %s13 = scalar_lea.sflag [#allocation3], 1
    %14 = vsyncpa %s13, 0
    %15 = vsyncpa [#allocation6], 0
    %s16 = scalar_lea.sflag [#allocation6], 1
    %17 = vsyncpa %s16, 0
    %18 = vsyncpa [#allocation4], 0
    %s19 = scalar_lea.sflag [#allocation4], 1
    %20 = vsyncpa %s19, 0
    %21 = vsyncpa [#allocation9], 0
    %s22 = scalar_lea.sflag [#allocation9], 1
    %23 = vsyncpa %s22, 0
    loop: start=0, step=1, limit=4
    $region2: #{tpu_custom_call.1} parent=1 // loop_pre_header
      _
    $region3: #{tpu_custom_call.1} parent=1 // loop_header
      %s25 = sphi 0, %s29
      %p26 = scmp.ge.s32.totalorder %s25, 4
      %s32 = sphi 0, %s51
      %s33 = sphi 0, %s47
      %s34 = sphi 0, %s43
      %s35 = sphi 0, %s32
      %s36 = sphi 0, %s33
      %s37 = sphi 0, %s34
      %s38 = sphi 0, %s35
      %s39 = sphi 0, %s36
      %s40 = sphi 0, %s37
      %s58 = sphi 0, %s60
      %s61 = sphi 0, %s58
      %s62 = sphi 0, %s61
      %s78 = sphi 0, %s62
      %s88 = sphi 0, %s90
      %s91 = sphi 0, %s88
      %s92 = sphi 0, %s91
      %s108 = sphi 0, %s92
      %s116 = sphi 0, %s118
      %s119 = sphi 0, %s116
      %s120 = sphi 0, %s119
      %s136 = sphi 0, %s120
      %s144 = sphi 0, %s146
      %s147 = sphi 0, %s144
      %s148 = sphi 0, %s147
      %s164 = sphi 0, %s148
      %s172 = sphi 0, %s174
      %s175 = sphi 0, %s172
      %s176 = sphi 0, %s175
      %s192 = sphi 0, %s176
      %s200 = sphi 0, %s202
      %s203 = sphi 0, %s200
      %s204 = sphi 0, %s203
      %s220 = sphi 0, %s204
      %s228 = sphi 0, %s230
      %s231 = sphi 0, %s228
      %s232 = sphi 0, %s231
      %s248 = sphi 0, %s232
    $region4: #{tpu_custom_call.1} parent=1 // loop_header_branch
      %28 = sbr.rel (%p26) target = $region8
    $region5: #{tpu_custom_call.1} parent=1 // loop_body
      %s30 = ssub.s32 %s25, 1
      %s31 = ssub.s32 %s25, 2
      %s41 = sadd.s32 1, %s34
      %p42 = scmp.ge.s32.totalorder %s41, 1
      %s43 = scalar_select %p42, 0, %s41
      %s44 = sadd.s32 1, %s33
      %s45 = scalar_select %p42, %s44, %s33
      %p46 = scmp.ge.s32.totalorder %s45, 1
      %s47 = scalar_select %p46, 0, %s45
      %s48 = sadd.s32 1, %s32
      %s49 = scalar_select %p46, %s48, %s32
      %p50 = scmp.ge.s32.totalorder %s49, 2
      %s51 = scalar_select %p50, 0, %s49
      %s52 = sadd.s32 %s33, %s34
      %s53 = sadd.s32 %s47, %s43
      %s54 = ssub.s32 %s32, %s51
      %s55 = ssub.s32 %s52, %s53
      %s56 = sor.u32 %s54, %s55
      %p57 = scmp.eq.s32.totalorder %s56, 0
      %s59 = sadd.s32 %s58, 1
      %s60 = scalar_select %p57, %s58, %s59
      %p63 = pneg %p57
      %p64 = scmp.eq.s32.totalorder %s25, 1
      %p65 = por %p63, %p64
      %p66 = scmp.ne.s32.totalorder %s58, %s61
      %p67 = scmp.eq.s32.totalorder %s25, 0
      %p68 = por %p66, %p67
      %p69 = scmp.ne.s32.totalorder %s58, %s61
      %p70 = scmp.eq.s32.totalorder %s30, 1
      %p71 = por %p69, %p70
      %p72 = scmp.ne.s32.totalorder %s61, %s62
      %p73 = scmp.eq.s32.totalorder %s30, 0
      %p74 = por %p72, %p73
      %p75 = scmp.ne.s32.totalorder %s61, %s62
      %p76 = scmp.eq.s32.totalorder %s31, 1
      %p77 = por %p75, %p76
      %p79 = scmp.ne.s32.totalorder %s62, %s78
      %p80 = scmp.eq.s32.totalorder %s31, 0
      %p81 = por %p79, %p80
      %s82 = sadd.s32 %s33, %s34
      %s83 = sadd.s32 %s47, %s43
      %s84 = ssub.s32 %s32, %s51
      %s85 = ssub.s32 %s82, %s83
      %s86 = sor.u32 %s84, %s85
      %p87 = scmp.eq.s32.totalorder %s86, 0
      %s89 = sadd.s32 %s88, 1
      %s90 = scalar_select %p87, %s88, %s89
      %p93 = pneg %p87
      %p94 = scmp.eq.s32.totalorder %s25, 1
      %p95 = por %p93, %p94
      %p96 = scmp.ne.s32.totalorder %s88, %s91
      %p97 = scmp.eq.s32.totalorder %s25, 0
      %p98 = por %p96, %p97
      %p99 = scmp.ne.s32.totalorder %s88, %s91
      %p100 = scmp.eq.s32.totalorder %s30, 1
      %p101 = por %p99, %p100
      %p102 = scmp.ne.s32.totalorder %s91, %s92
      %p103 = scmp.eq.s32.totalorder %s30, 0
      %p104 = por %p102, %p103
      %p105 = scmp.ne.s32.totalorder %s91, %s92
      %p106 = scmp.eq.s32.totalorder %s31, 1
      %p107 = por %p105, %p106
      %p109 = scmp.ne.s32.totalorder %s92, %s108
      %p110 = scmp.eq.s32.totalorder %s31, 0
      %p111 = por %p109, %p110
      %s112 = ssub.s32 %s32, %s51
      %s113 = ssub.s32 %s33, %s47
      %s114 = sor.u32 %s112, %s113
      %p115 = scmp.eq.s32.totalorder %s114, 0
      %s117 = sadd.s32 %s116, 1
      %s118 = scalar_select %p115, %s116, %s117
      %p121 = pneg %p115
      %p122 = scmp.eq.s32.totalorder %s25, 1
      %p123 = por %p121, %p122
      %p124 = scmp.ne.s32.totalorder %s116, %s119
      %p125 = scmp.eq.s32.totalorder %s25, 0
      %p126 = por %p124, %p125
      %p127 = scmp.ne.s32.totalorder %s116, %s119
      %p128 = scmp.eq.s32.totalorder %s30, 1
      %p129 = por %p127, %p128
      %p130 = scmp.ne.s32.totalorder %s119, %s120
      %p131 = scmp.eq.s32.totalorder %s30, 0
      %p132 = por %p130, %p131
      %p133 = scmp.ne.s32.totalorder %s119, %s120
      %p134 = scmp.eq.s32.totalorder %s31, 1
      %p135 = por %p133, %p134
      %p137 = scmp.ne.s32.totalorder %s120, %s136
      %p138 = scmp.eq.s32.totalorder %s31, 0
      %p139 = por %p137, %p138
      %s140 = ssub.s32 %s32, %s51
      %s141 = ssub.s32 %s33, %s47
      %s142 = sor.u32 %s140, %s141
      %p143 = scmp.eq.s32.totalorder %s142, 0
      %s145 = sadd.s32 %s144, 1
      %s146 = scalar_select %p143, %s144, %s145
      %p149 = pneg %p143
      %p150 = scmp.eq.s32.totalorder %s25, 1
      %p151 = por %p149, %p150
      %p152 = scmp.ne.s32.totalorder %s144, %s147
      %p153 = scmp.eq.s32.totalorder %s25, 0
      %p154 = por %p152, %p153
      %p155 = scmp.ne.s32.totalorder %s144, %s147
      %p156 = scmp.eq.s32.totalorder %s30, 1
      %p157 = por %p155, %p156
      %p158 = scmp.ne.s32.totalorder %s147, %s148
      %p159 = scmp.eq.s32.totalorder %s30, 0
      %p160 = por %p158, %p159
      %p161 = scmp.ne.s32.totalorder %s147, %s148
      %p162 = scmp.eq.s32.totalorder %s31, 1
      %p163 = por %p161, %p162
      %p165 = scmp.ne.s32.totalorder %s148, %s164
      %p166 = scmp.eq.s32.totalorder %s31, 0
      %p167 = por %p165, %p166
      %s168 = ssub.s32 %s32, %s51
      %s169 = ssub.s32 %s33, %s47
      %s170 = sor.u32 %s168, %s169
      %p171 = scmp.eq.s32.totalorder %s170, 0
      %s173 = sadd.s32 %s172, 1
      %s174 = scalar_select %p171, %s172, %s173
      %p177 = pneg %p171
      %p178 = scmp.eq.s32.totalorder %s25, 1
      %p179 = por %p177, %p178
      %p180 = scmp.ne.s32.totalorder %s172, %s175
      %p181 = scmp.eq.s32.totalorder %s25, 0
      %p182 = por %p180, %p181
      %p183 = scmp.ne.s32.totalorder %s172, %s175
      %p184 = scmp.eq.s32.totalorder %s30, 1
      %p185 = por %p183, %p184
      %p186 = scmp.ne.s32.totalorder %s175, %s176
      %p187 = scmp.eq.s32.totalorder %s30, 0
      %p188 = por %p186, %p187
      %p189 = scmp.ne.s32.totalorder %s175, %s176
      %p190 = scmp.eq.s32.totalorder %s31, 1
      %p191 = por %p189, %p190
      %p193 = scmp.ne.s32.totalorder %s176, %s192
      %p194 = scmp.eq.s32.totalorder %s31, 0
      %p195 = por %p193, %p194
      %s196 = ssub.s32 %s32, %s51
      %s197 = ssub.s32 %s33, %s47
      %s198 = sor.u32 %s196, %s197
      %p199 = scmp.eq.s32.totalorder %s198, 0
      %s201 = sadd.s32 %s200, 1
      %s202 = scalar_select %p199, %s200, %s201
      %p205 = pneg %p199
      %p206 = scmp.eq.s32.totalorder %s25, 1
      %p207 = por %p205, %p206
      %p208 = scmp.ne.s32.totalorder %s200, %s203
      %p209 = scmp.eq.s32.totalorder %s25, 0
      %p210 = por %p208, %p209
      %p211 = scmp.ne.s32.totalorder %s200, %s203
      %p212 = scmp.eq.s32.totalorder %s30, 1
      %p213 = por %p211, %p212
      %p214 = scmp.ne.s32.totalorder %s203, %s204
      %p215 = scmp.eq.s32.totalorder %s30, 0
      %p216 = por %p214, %p215
      %p217 = scmp.ne.s32.totalorder %s203, %s204
      %p218 = scmp.eq.s32.totalorder %s31, 1
      %p219 = por %p217, %p218
      %p221 = scmp.ne.s32.totalorder %s204, %s220
      %p222 = scmp.eq.s32.totalorder %s31, 0
      %p223 = por %p221, %p222
      %s224 = ssub.s32 %s32, %s51
      %s225 = ssub.s32 %s33, %s47
      %s226 = sor.u32 %s224, %s225
      %p227 = scmp.eq.s32.totalorder %s226, 0
      %s229 = sadd.s32 %s228, 1
      %s230 = scalar_select %p227, %s228, %s229
      %p233 = pneg %p227
      %p234 = scmp.eq.s32.totalorder %s25, 1
      %p235 = por %p233, %p234
      %p236 = scmp.ne.s32.totalorder %s228, %s231
      %p237 = scmp.eq.s32.totalorder %s25, 0
      %p238 = por %p236, %p237
      %p239 = scmp.ne.s32.totalorder %s228, %s231
      %p240 = scmp.eq.s32.totalorder %s30, 1
      %p241 = por %p239, %p240
      %p242 = scmp.ne.s32.totalorder %s231, %s232
      %p243 = scmp.eq.s32.totalorder %s30, 0
      %p244 = por %p242, %p243
      %p245 = scmp.ne.s32.totalorder %s231, %s232
      %p246 = scmp.eq.s32.totalorder %s31, 1
      %p247 = por %p245, %p246
      %p249 = scmp.ne.s32.totalorder %s232, %s248
      %p250 = scmp.eq.s32.totalorder %s31, 0
      %p251 = por %p249, %p250
      %p252 = scmp.le.s32.totalorder 1, %s25
      %p253 = scmp.lt.s32.totalorder %s25, 3
      %p254 = pnand %p252, %p253
      %p255 = pneg %p254
      // Predicated region
      $region9: #{tpu_custom_call.1} parent=5 // pred_check
        _
      $region10: #{tpu_custom_call.1} parent=5 // pred_check_branch
        %257 = sbr.rel (%p254) target = $region12
      $region11: #{tpu_custom_call.1} parent=5 // pred_region
        %s258 = ssub.s32 %s25, 1
      $region12: #{tpu_custom_call.1} parent=5 // pred_fallthru
        _
      %p259 = scmp.lt.s32.totalorder %s25, 2
      // Predicated region
      $region13: #{tpu_custom_call.1} parent=5 // pred_check
        %p260 = pneg %p259
      $region14: #{tpu_custom_call.1} parent=5 // pred_check_branch
        %262 = sbr.rel (%p260) target = $region16
      $region15: #{tpu_custom_call.1} parent=5 // pred_region
        // Predicated region
        $region17: #{tpu_custom_call.1} parent=15 // pred_check
          %p263 = pneg %p68
        $region18: #{tpu_custom_call.1} parent=15 // pred_check_branch
          %265 = sbr.rel (%p263) target = $region20
        $region19: #{tpu_custom_call.1} parent=15 // pred_region
          %s266 = sand.u32 %s58, 1
          %s267 = scalar_lea.sflag [#allocation3], %s266
          %s268 = sand.u32 %s58, 1
          %s269 = smul.addr %s268, 8
          %s270 = scalar_lea.vmem [#allocation2], %s269
          %s271 = sadd.s32 %s33, %s34
          %s272 = smul.u32 2, %s271
          %274 = vsyncadd %s267, 0
          %s275 = smul.addr %s32, 2
          %s276 = sadd.s32 %s272, %s275
          %s277 = smul.addr %s276, 4
          %s278 = scalar_lea.hbm %s0, %s277
          %s280 = sshll.u32 %s278, 4
          %s281 = int_to_ptr.hbm [resolvable:$true] %s280
          %s282 = sshll.u32 %s270, 4
          %s283 = int_to_ptr.vmem [resolvable:$true] %s282
          %285 = dma.hbm_to_vmem [thread:$0]  %s281, 128, %s283, %s267
        $region20: #{tpu_custom_call.1} parent=15 // pred_fallthru
          _
        // Predicated region
        $region21: #{tpu_custom_call.1} parent=15 // pred_check
          %p286 = pneg %p98
        $region22: #{tpu_custom_call.1} parent=15 // pred_check_branch
          %288 = sbr.rel (%p286) target = $region24
        $region23: #{tpu_custom_call.1} parent=15 // pred_region
          %s289 = sand.u32 %s88, 1
          %s290 = scalar_lea.sflag [#allocation6], %s289
          %s291 = sand.u32 %s88, 1
          %s292 = smul.addr %s291, 8
          %s293 = scalar_lea.vmem [#allocation5], %s292
          %s294 = sadd.s32 %s33, %s34
          %s295 = smul.u32 2, %s294
          %297 = vsyncadd %s290, 0
          %s298 = smul.addr %s32, 2
          %s299 = sadd.s32 %s295, %s298
          %s300 = smul.addr %s299, 4
          %s301 = scalar_lea.hbm %s1, %s300
          %s303 = sshll.u32 %s301, 4
          %s304 = int_to_ptr.hbm [resolvable:$true] %s303
          %s305 = sshll.u32 %s293, 4
          %s306 = int_to_ptr.vmem [resolvable:$true] %s305
          %308 = dma.hbm_to_vmem [thread:$0]  %s304, 128, %s306, %s290
        $region24: #{tpu_custom_call.1} parent=15 // pred_fallthru
          _
      $region16: #{tpu_custom_call.1} parent=5 // pred_fallthru
        _
      %p309 = scmp.le.s32.totalorder 1, %s25
      %p310 = scmp.lt.s32.totalorder %s25, 3
      %p311 = pnand %p309, %p310
      %p312 = pneg %p311
      // Predicated region
      $region25: #{tpu_custom_call.1} parent=5 // pred_check
        _
      $region26: #{tpu_custom_call.1} parent=5 // pred_check_branch
        %314 = sbr.rel (%p311) target = $region28
      $region27: #{tpu_custom_call.1} parent=5 // pred_region
        %s315 = ssub.s32 %s25, 1
        %s316 = sand.u32 %s61, 1
        %s317 = scalar_lea.sflag [#allocation3], %s316
        %s318 = sand.u32 %s61, 1
        %s319 = smul.addr %s318, 8
        %s320 = scalar_lea.vmem [#allocation2], %s319
        // Predicated region
        $region29: #{tpu_custom_call.1} parent=27 // pred_check
          %p321 = pneg %p74
        $region30: #{tpu_custom_call.1} parent=27 // pred_check_branch
          %323 = sbr.rel (%p321) target = $region32
        $region31: #{tpu_custom_call.1} parent=27 // pred_region
          %325 = dma.done %s317, 128
        $region32: #{tpu_custom_call.1} parent=27 // pred_fallthru
          _
        %s326 = sand.u32 %s91, 1
        %s327 = scalar_lea.sflag [#allocation6], %s326
        %s328 = sand.u32 %s91, 1
        %s329 = smul.addr %s328, 8
        %s330 = scalar_lea.vmem [#allocation5], %s329
        // Predicated region
        $region33: #{tpu_custom_call.1} parent=27 // pred_check
          %p331 = pneg %p104
        $region34: #{tpu_custom_call.1} parent=27 // pred_check_branch
          %333 = sbr.rel (%p331) target = $region36
        $region35: #{tpu_custom_call.1} parent=27 // pred_region
          %335 = dma.done %s327, 128
        $region36: #{tpu_custom_call.1} parent=27 // pred_fallthru
          _
        %s336 = sand.u32 %s61, 1
        %s337 = scalar_lea.sflag [#allocation3], %s336
        %s338 = sand.u32 %s61, 1
        %s339 = smul.addr %s338, 8
        %s340 = scalar_lea.vmem [#allocation2], %s339
        %p341 = pneg %p74
        %p342 = pneg %p71
        %s343 = sand.u32 %s91, 1
        %s344 = scalar_lea.sflag [#allocation6], %s343
        %s345 = sand.u32 %s91, 1
        %s346 = smul.addr %s345, 8
        %s347 = scalar_lea.vmem [#allocation5], %s346
        %p348 = pneg %p104
        %p349 = pneg %p101
        %p350 = pneg %p132
        %p351 = pneg %p129
        %s352 = sand.u32 %s119, 1
        %s353 = scalar_lea.sflag [#allocation4], %s352
        %s354 = sand.u32 %s119, 1
        %s355 = smul.addr %s354, 4
        %s356 = scalar_lea.vmem [#allocation7], %s355
        %p357 = pneg %p160
        %p358 = pneg %p157
        %s359 = sand.u32 %s30, 1
        %s360 = scalar_lea.sflag [#allocation9], %s359
        %s361 = sand.u32 %s147, 1
        %s362 = smul.addr %s361, 4
        %s363 = scalar_lea.vmem [#allocation8], %s362
        %p364 = pneg %p188
        %p365 = pneg %p185
        %s366 = sand.u32 %s30, 1
        %s367 = scalar_lea.sflag [#allocation9], %s366
        %s368 = sand.u32 %s175, 1
        %s369 = smul.addr %s368, 4
        %s370 = scalar_lea.vmem [#allocation10], %s369
        %p371 = pneg %p216
        %p372 = pneg %p213
        %p373 = scmp.lt.s32.totalorder %s35, 1
        %s374 = scalar_select %p373, %s35, 1
        %p375 = scmp.lt.s32.totalorder %s36, 0
        %s376 = scalar_select %p375, %s36, 0
        %s377 = sadd.s32 %s376, %s374
        %s378 = smul.addr %s377, 4
        %s379 = scalar_lea.vmem %s5, %s378
        %p380 = pneg %p244
        %p381 = pneg %p241
        %p382 = scmp.lt.s32.totalorder %s35, 1
        %s383 = scalar_select %p382, %s35, 1
        %p384 = scmp.lt.s32.totalorder %s36, 0
        %s385 = scalar_select %p384, %s36, 0
        %s386 = sadd.s32 %s385, %s383
        %s387 = smul.addr %s386, 4
        %s388 = scalar_lea.vmem %s6, %s387
        %s389 = sadd.s32 %s36, %s37
        %s390 = smul.u32 2, %s389
        %s391 = sadd.s32 %s36, %s37
        %s392 = smul.u32 2, %s391
        %p393 = scmp.lt.s32.totalorder %s35, 1
        %s394 = scalar_select %p393, %s35, 1
        %p395 = scmp.lt.s32.totalorder %s36, 0
        %s396 = scalar_select %p395, %s36, 0
        %s397 = sadd.s32 %s396, %s394
        %s398 = smul.addr %s397, 4
        %s399 = scalar_lea.vmem %s5, %s398
        %p400 = scmp.lt.s32.totalorder %s35, 1
        %s401 = scalar_select %p400, %s35, 1
        %p402 = scmp.lt.s32.totalorder %s36, 0
        %s403 = scalar_select %p402, %s36, 0
        %s404 = sadd.s32 %s403, %s401
        %s405 = smul.addr %s404, 4
        %s406 = scalar_lea.vmem %s6, %s405
        %p407 = scmp.eq.s32.totalorder %s37, 0
        // Predicated region
        $region37: #{tpu_custom_call.1} parent=27 // pred_check
          %p408 = pneg %p407
        $region38: #{tpu_custom_call.1} parent=27 // pred_check_branch
          %410 = sbr.rel (%p408) target = $region40
        $region39: #{tpu_custom_call.1} parent=27 // pred_region
          %vm411 = vcmask 27648
          %412 = vst.msk [vmem:[%s356] sm:$0xf] %vm411, 0.0
          %413 = vst.msk [vmem:[%s363] sm:$0xf] %vm411, 0.0
          %414 = vst.msk [vmem:[%s370] sm:$0xf] %vm411, 0.0
          %vm415 = vcmask 3072
          %416 = vst.msk [vmem:[%s399] sm:$0xf] %vm415, 0.0
          %417 = vst.msk [vmem:[%s406] sm:$0xf] %vm415, 0.0
        $region40: #{tpu_custom_call.1} parent=27 // pred_fallthru
          _
        %v418 = vld [vmem:[%s320] sm:$0xff]
        %v419 = vld [vmem:[%s330] sm:$0xff]
        %v420 = vld [vmem:[%s356] sm:$0xf]
        %422 = vst [vmem:[#allocation1] ss:$2 sm:$0xff] %v418
        %v423 = vld.sshfl [vmem:[#allocation1] sm:$0xff pattern:$0x75316420]
        %v424 = vld.sshfl [vmem:[#allocation1 + $0x8] sm:$0xff pattern:$0x75316420]
        %427 = vst [vmem:[#allocation1] ss:$2 sm:$0xff] %v418
        %v428 = vld.sshfl [vmem:[#allocation1] sm:$0xff pattern:$0x75316420]
        %v429 = vld.sshfl [vmem:[#allocation1 + $0x8] sm:$0xff pattern:$0x75316420]
        %432 = vmatpush.xpose.msra.mxu0 0.0
        %433 = vmatpush.xpose.msra.mxu0 0.0
        %434 = vmatpush.xpose.msra.mxu0 0.0
        %435 = vmatpush.xpose.msra.mxu0 0.0
        %436 = vmatpush.xpose.msra.mxu0 0.0
        %437 = vmatpush.xpose.msra.mxu0 0.0
        %438 = vmatpush.xpose.msra.mxu0 0.0
        %439 = vmatpush.xpose.msra.mxu0 0.0
        %440 = vmatpush.xpose.msra.mxu0 0.0
        %441 = vmatpush.xpose.msra.mxu0 0.0
        %442 = vmatpush.xpose.msra.mxu0 0.0
        %443 = vmatpush.xpose.msra.mxu0 0.0
        %444 = vmatpush.xpose.msra.mxu0 0.0
        %445 = vmatpush.xpose.msra.mxu0 0.0
        %446 = vmatpush.xpose.msra.mxu0 0.0
        %447 = vmatpush.xpose.msra.mxu0 %v428
        %448 = vmatmul.f32.gmra.mxu0 %v423
        %v449 = vpop.f32.mrf.mxu0
        %v450 = vadd.f32 0.0, %v449
        %451 = vdwg.mxu0
        %452 = vmatpush.xpose.msra.mxu0 0.0
        %453 = vmatpush.xpose.msra.mxu0 0.0
        %454 = vmatpush.xpose.msra.mxu0 0.0
        %455 = vmatpush.xpose.msra.mxu0 0.0
        %456 = vmatpush.xpose.msra.mxu0 0.0
        %457 = vmatpush.xpose.msra.mxu0 0.0
        %458 = vmatpush.xpose.msra.mxu0 0.0
        %459 = vmatpush.xpose.msra.mxu0 0.0
        %460 = vmatpush.xpose.msra.mxu0 0.0
        %461 = vmatpush.xpose.msra.mxu0 0.0
        %462 = vmatpush.xpose.msra.mxu0 0.0
        %463 = vmatpush.xpose.msra.mxu0 0.0
        %464 = vmatpush.xpose.msra.mxu0 0.0
        %465 = vmatpush.xpose.msra.mxu0 0.0
        %466 = vmatpush.xpose.msra.mxu0 0.0
        %467 = vmatpush.xpose.msra.mxu0 %v429
        %468 = vmatmul.f32.gmra.mxu0 %v424
        %v469 = vpop.f32.mrf.mxu0
        %v470 = vadd.f32 %v450, %v469
        %471 = vdwg.mxu0
        %v472 = vadd.f32 %v420, %v470
        %vm473 = vcmask 27648
        %474 = vst.msk [vmem:[%s356] sm:$0xf] %vm473, %v472
        %v475 = vld [vmem:[%s363] sm:$0xf]
        %476 = vst [vmem:[#allocation1] ss:$2 sm:$0xff] %v418
        %v477 = vld.sshfl [vmem:[#allocation1] sm:$0xff pattern:$0x75316420]
        %v478 = vld.sshfl [vmem:[#allocation1 + $0x8] sm:$0xff pattern:$0x75316420]
        %482 = vst [vmem:[#allocation1] ss:$2 sm:$0xff] %v419
        %v483 = vld.sshfl [vmem:[#allocation1] sm:$0xff pattern:$0x75316420]
        %v484 = vld.sshfl [vmem:[#allocation1 + $0x8] sm:$0xff pattern:$0x75316420]
        %487 = vmatpush.xpose.msra.mxu0 0.0
        %488 = vmatpush.xpose.msra.mxu0 0.0
        %489 = vmatpush.xpose.msra.mxu0 0.0
        %490 = vmatpush.xpose.msra.mxu0 0.0
        %491 = vmatpush.xpose.msra.mxu0 0.0
        %492 = vmatpush.xpose.msra.mxu0 0.0
        %493 = vmatpush.xpose.msra.mxu0 0.0
        %494 = vmatpush.xpose.msra.mxu0 0.0
        %495 = vmatpush.xpose.msra.mxu0 0.0
        %496 = vmatpush.xpose.msra.mxu0 0.0
        %497 = vmatpush.xpose.msra.mxu0 0.0
        %498 = vmatpush.xpose.msra.mxu0 0.0
        %499 = vmatpush.xpose.msra.mxu0 0.0
        %500 = vmatpush.xpose.msra.mxu0 0.0
        %501 = vmatpush.xpose.msra.mxu0 0.0
        %502 = vmatpush.xpose.msra.mxu0 %v483
        %503 = vmatmul.f32.gmra.mxu0 %v477
        %v504 = vpop.f32.mrf.mxu0
        %v505 = vadd.f32 0.0, %v504
        %506 = vdwg.mxu0
        %507 = vmatpush.xpose.msra.mxu0 0.0
        %508 = vmatpush.xpose.msra.mxu0 0.0
        %509 = vmatpush.xpose.msra.mxu0 0.0
        %510 = vmatpush.xpose.msra.mxu0 0.0
        %511 = vmatpush.xpose.msra.mxu0 0.0
        %512 = vmatpush.xpose.msra.mxu0 0.0
        %513 = vmatpush.xpose.msra.mxu0 0.0
        %514 = vmatpush.xpose.msra.mxu0 0.0
        %515 = vmatpush.xpose.msra.mxu0 0.0
        %516 = vmatpush.xpose.msra.mxu0 0.0
        %517 = vmatpush.xpose.msra.mxu0 0.0
        %518 = vmatpush.xpose.msra.mxu0 0.0
        %519 = vmatpush.xpose.msra.mxu0 0.0
        %520 = vmatpush.xpose.msra.mxu0 0.0
        %521 = vmatpush.xpose.msra.mxu0 0.0
        %522 = vmatpush.xpose.msra.mxu0 %v484
        %523 = vmatmul.f32.gmra.mxu0 %v478
        %v524 = vpop.f32.mrf.mxu0
        %v525 = vadd.f32 %v505, %v524
        %526 = vdwg.mxu0
        %v527 = vadd.f32 %v475, %v525
        %528 = vst.msk [vmem:[%s363] sm:$0xf] %vm473, %v527
        %v529 = vld [vmem:[%s370] sm:$0xf]
        %530 = vst [vmem:[#allocation1] ss:$2 sm:$0xff] %v419
        %v531 = vld.sshfl [vmem:[#allocation1] sm:$0xff pattern:$0x75316420]
        %v532 = vld.sshfl [vmem:[#allocation1 + $0x8] sm:$0xff pattern:$0x75316420]
        %535 = vst [vmem:[#allocation1] ss:$2 sm:$0xff] %v419
        %v536 = vld.sshfl [vmem:[#allocation1] sm:$0xff pattern:$0x75316420]
        %v537 = vld.sshfl [vmem:[#allocation1 + $0x8] sm:$0xff pattern:$0x75316420]
        %540 = vmatpush.xpose.msra.mxu0 0.0
        %541 = vmatpush.xpose.msra.mxu0 0.0
        %542 = vmatpush.xpose.msra.mxu0 0.0
        %543 = vmatpush.xpose.msra.mxu0 0.0
        %544 = vmatpush.xpose.msra.mxu0 0.0
        %545 = vmatpush.xpose.msra.mxu0 0.0
        %546 = vmatpush.xpose.msra.mxu0 0.0
        %547 = vmatpush.xpose.msra.mxu0 0.0
        %548 = vmatpush.xpose.msra.mxu0 0.0
        %549 = vmatpush.xpose.msra.mxu0 0.0
        %550 = vmatpush.xpose.msra.mxu0 0.0
        %551 = vmatpush.xpose.msra.mxu0 0.0
        %552 = vmatpush.xpose.msra.mxu0 0.0
        %553 = vmatpush.xpose.msra.mxu0 0.0
        %554 = vmatpush.xpose.msra.mxu0 0.0
        %555 = vmatpush.xpose.msra.mxu0 %v536
        %556 = vmatmul.f32.gmra.mxu0 %v531
        %v557 = vpop.f32.mrf.mxu0
        %v558 = vadd.f32 0.0, %v557
        %559 = vdwg.mxu0
        %560 = vmatpush.xpose.msra.mxu0 0.0
        %561 = vmatpush.xpose.msra.mxu0 0.0
        %562 = vmatpush.xpose.msra.mxu0 0.0
        %563 = vmatpush.xpose.msra.mxu0 0.0
        %564 = vmatpush.xpose.msra.mxu0 0.0
        %565 = vmatpush.xpose.msra.mxu0 0.0
        %566 = vmatpush.xpose.msra.mxu0 0.0
        %567 = vmatpush.xpose.msra.mxu0 0.0
        %568 = vmatpush.xpose.msra.mxu0 0.0
        %569 = vmatpush.xpose.msra.mxu0 0.0
        %570 = vmatpush.xpose.msra.mxu0 0.0
        %571 = vmatpush.xpose.msra.mxu0 0.0
        %572 = vmatpush.xpose.msra.mxu0 0.0
        %573 = vmatpush.xpose.msra.mxu0 0.0
        %574 = vmatpush.xpose.msra.mxu0 0.0
        %575 = vmatpush.xpose.msra.mxu0 %v537
        %576 = vmatmul.f32.gmra.mxu0 %v532
        %v577 = vpop.f32.mrf.mxu0
        %v578 = vadd.f32 %v558, %v577
        %579 = vdwg.mxu0
        %v580 = vadd.f32 %v529, %v578
        %581 = vst.msk [vmem:[%s370] sm:$0xf] %vm473, %v580
        %v582 = vld [vmem:[%s399] sm:$0xf]
        %583 = vst [vmem:[#allocation1] ss:$2 sm:$0xff] %v418
        %v584 = vld.sshfl [vmem:[#allocation1] sm:$0xff pattern:$0x75316420]
        %v585 = vld.sshfl [vmem:[#allocation1 + $0x8] sm:$0xff pattern:$0x75316420]
        %vm588 = vcmask 1043456
        %v589 = vsel %vm588, %v584, 0.0
        %v590 = vsel %vm588, %v585, 0.0
        %v591 = vadd.f32 %v589, %v590
        %592 = vadd.xlane.f32.xlu0 %v591
        %v593 = vpop.xlane.xlu0 %592
        %v594 = vadd.f32 %v582, %v593
        %vm595 = vcmask 3072
        %596 = vst.msk [vmem:[%s399] sm:$0xf] %vm595, %v594
        %v597 = vld [vmem:[%s406] sm:$0xf]
        %598 = vst [vmem:[#allocation1] ss:$2 sm:$0xff] %v419
        %v599 = vld.sshfl [vmem:[#allocation1] sm:$0xff pattern:$0x75316420]
        %v600 = vld.sshfl [vmem:[#allocation1 + $0x8] sm:$0xff pattern:$0x75316420]
        %v603 = vsel %vm588, %v599, 0.0
        %v604 = vsel %vm588, %v600, 0.0
        %v605 = vadd.f32 %v603, %v604
        %606 = vadd.xlane.f32.xlu0 %v605
        %v607 = vpop.xlane.xlu0 %606
        %v608 = vadd.f32 %v597, %v607
        %609 = vst.msk [vmem:[%s406] sm:$0xf] %vm595, %v608
        %s610 = sand.u32 %s119, 1
        %s611 = scalar_lea.sflag [#allocation4], %s610
        %s612 = sand.u32 %s119, 1
        %s613 = smul.addr %s612, 4
        %s614 = scalar_lea.vmem [#allocation7], %s613
        %s615 = sand.u32 %s30, 1
        %s616 = scalar_lea.sflag [#allocation9], %s615
        %s617 = sand.u32 %s147, 1
        %s618 = smul.addr %s617, 4
        %s619 = scalar_lea.vmem [#allocation8], %s618
        %s620 = sand.u32 %s30, 1
        %s621 = scalar_lea.sflag [#allocation9], %s620
        %s622 = sand.u32 %s175, 1
        %s623 = smul.addr %s622, 4
        %s624 = scalar_lea.vmem [#allocation10], %s623
        %p625 = scmp.lt.s32.totalorder %s35, 1
        %s626 = scalar_select %p625, %s35, 1
        %p627 = scmp.lt.s32.totalorder %s36, 0
        %s628 = scalar_select %p627, %s36, 0
        %s629 = sadd.s32 %s628, %s626
        %s630 = smul.addr %s629, 4
        %s631 = scalar_lea.vmem %s5, %s630
        %p632 = scmp.lt.s32.totalorder %s35, 1
        %s633 = scalar_select %p632, %s35, 1
        %p634 = scmp.lt.s32.totalorder %s36, 0
        %s635 = scalar_select %p634, %s36, 0
        %s636 = sadd.s32 %s635, %s633
        %s637 = smul.addr %s636, 4
        %s638 = scalar_lea.vmem %s6, %s637
        // Predicated region
        $region41: #{tpu_custom_call.1} parent=27 // pred_check
          %p639 = pneg %p129
        $region42: #{tpu_custom_call.1} parent=27 // pred_check_branch
          %641 = sbr.rel (%p639) target = $region44
        $region43: #{tpu_custom_call.1} parent=27 // pred_region
          %643 = vsyncadd %s611, 0
          %s644 = sadd.s32 %s36, %s35
          %s645 = smul.addr %s644, 4
          %s646 = scalar_lea.hbm %s2, %s645
          %s648 = sshll.u32 %s614, 4
          %s649 = int_to_ptr.vmem [resolvable:$true] %s648
          %s650 = sshll.u32 %s646, 4
          %s651 = int_to_ptr.hbm [resolvable:$true] %s650
          %653 = dma.vmem_to_hbm [thread:$0]  %s649, 64, %s651, %s611
        $region44: #{tpu_custom_call.1} parent=27 // pred_fallthru
          _
        // Predicated region
        $region45: #{tpu_custom_call.1} parent=27 // pred_check
          %p654 = pneg %p157
        $region46: #{tpu_custom_call.1} parent=27 // pred_check_branch
          %656 = sbr.rel (%p654) target = $region48
        $region47: #{tpu_custom_call.1} parent=27 // pred_region
          %658 = vsyncadd %s616, 0
          %s659 = sadd.s32 %s36, %s35
          %s660 = smul.addr %s659, 4
          %s661 = scalar_lea.hbm %s3, %s660
          %s663 = sshll.u32 %s619, 4
          %s664 = int_to_ptr.vmem [resolvable:$true] %s663
          %s665 = sshll.u32 %s661, 4
          %s666 = int_to_ptr.hbm [resolvable:$true] %s665
          %668 = dma.vmem_to_hbm [thread:$0]  %s664, 64, %s666, %s616
        $region48: #{tpu_custom_call.1} parent=27 // pred_fallthru
          _
        // Predicated region
        $region49: #{tpu_custom_call.1} parent=27 // pred_check
          %p669 = pneg %p185
        $region50: #{tpu_custom_call.1} parent=27 // pred_check_branch
          %671 = sbr.rel (%p669) target = $region52
        $region51: #{tpu_custom_call.1} parent=27 // pred_region
          %673 = vsyncadd %s621, 0
          %s674 = sadd.s32 %s36, %s35
          %s675 = smul.addr %s674, 4
          %s676 = scalar_lea.hbm %s4, %s675
          %s678 = sshll.u32 %s624, 4
          %s679 = int_to_ptr.vmem [resolvable:$true] %s678
          %s680 = sshll.u32 %s676, 4
          %s681 = int_to_ptr.hbm [resolvable:$true] %s680
          %683 = dma.vmem_to_hbm [thread:$0]  %s679, 64, %s681, %s621
        $region52: #{tpu_custom_call.1} parent=27 // pred_fallthru
          _
        // Predicated region
        $region53: #{tpu_custom_call.1} parent=27 // pred_check
          %p684 = pneg %p213
        $region54: #{tpu_custom_call.1} parent=27 // pred_check_branch
          %686 = sbr.rel (%p684) target = $region56
        $region55: #{tpu_custom_call.1} parent=27 // pred_region
          _
        $region56: #{tpu_custom_call.1} parent=27 // pred_fallthru
          _
        // Predicated region
        $region57: #{tpu_custom_call.1} parent=27 // pred_check
          %p687 = pneg %p241
        $region58: #{tpu_custom_call.1} parent=27 // pred_check_branch
          %689 = sbr.rel (%p687) target = $region60
        $region59: #{tpu_custom_call.1} parent=27 // pred_region
          _
        $region60: #{tpu_custom_call.1} parent=27 // pred_fallthru
          _
      $region28: #{tpu_custom_call.1} parent=5 // pred_fallthru
        _
      %p690 = scmp.le.s32.totalorder 2, %s25
      // Predicated region
      $region61: #{tpu_custom_call.1} parent=5 // pred_check
        %p691 = pneg %p690
      $region62: #{tpu_custom_call.1} parent=5 // pred_check_branch
        %693 = sbr.rel (%p691) target = $region64
      $region63: #{tpu_custom_call.1} parent=5 // pred_region
        %s694 = ssub.s32 %s25, 2
        // Predicated region
        $region65: #{tpu_custom_call.1} parent=63 // pred_check
          %p695 = pneg %p135
        $region66: #{tpu_custom_call.1} parent=63 // pred_check_branch
          %697 = sbr.rel (%p695) target = $region68
        $region67: #{tpu_custom_call.1} parent=63 // pred_region
          %s698 = sand.u32 %s120, 1
          %s699 = scalar_lea.sflag [#allocation4], %s698
          %s700 = sand.u32 %s120, 1
          %s701 = smul.addr %s700, 4
          %s702 = scalar_lea.vmem [#allocation7], %s701
          %704 = dma.done %s699, 64
        $region68: #{tpu_custom_call.1} parent=63 // pred_fallthru
          _
        // Predicated region
        $region69: #{tpu_custom_call.1} parent=63 // pred_check
          %p705 = pneg %p163
        $region70: #{tpu_custom_call.1} parent=63 // pred_check_branch
          %707 = sbr.rel (%p705) target = $region72
        $region71: #{tpu_custom_call.1} parent=63 // pred_region
          %s708 = sand.u32 %s31, 1
          %s709 = scalar_lea.sflag [#allocation9], %s708
          %s710 = sand.u32 %s148, 1
          %s711 = smul.addr %s710, 4
          %s712 = scalar_lea.vmem [#allocation8], %s711
          %714 = dma.done %s709, 64
        $region72: #{tpu_custom_call.1} parent=63 // pred_fallthru
          _
        // Predicated region
        $region73: #{tpu_custom_call.1} parent=63 // pred_check
          %p715 = pneg %p191
        $region74: #{tpu_custom_call.1} parent=63 // pred_check_branch
          %717 = sbr.rel (%p715) target = $region76
        $region75: #{tpu_custom_call.1} parent=63 // pred_region
          %s718 = sand.u32 %s31, 1
          %s719 = scalar_lea.sflag [#allocation9], %s718
          %s720 = sand.u32 %s176, 1
          %s721 = smul.addr %s720, 4
          %s722 = scalar_lea.vmem [#allocation10], %s721
          %724 = dma.done %s719, 64
        $region76: #{tpu_custom_call.1} parent=63 // pred_fallthru
          _
        // Predicated region
        $region77: #{tpu_custom_call.1} parent=63 // pred_check
          %p725 = pneg %p219
        $region78: #{tpu_custom_call.1} parent=63 // pred_check_branch
          %727 = sbr.rel (%p725) target = $region80
        $region79: #{tpu_custom_call.1} parent=63 // pred_region
          %p728 = scmp.lt.s32.totalorder %s38, 1
          %s729 = scalar_select %p728, %s38, 1
          %p730 = scmp.lt.s32.totalorder %s39, 0
          %s731 = scalar_select %p730, %s39, 0
          %s732 = sadd.s32 %s731, %s729
          %s733 = smul.addr %s732, 4
          %s734 = scalar_lea.vmem %s5, %s733
        $region80: #{tpu_custom_call.1} parent=63 // pred_fallthru
          _
        // Predicated region
        $region81: #{tpu_custom_call.1} parent=63 // pred_check
          %p735 = pneg %p247
        $region82: #{tpu_custom_call.1} parent=63 // pred_check_branch
          %737 = sbr.rel (%p735) target = $region84
        $region83: #{tpu_custom_call.1} parent=63 // pred_region
          %p738 = scmp.lt.s32.totalorder %s38, 1
          %s739 = scalar_select %p738, %s38, 1
          %p740 = scmp.lt.s32.totalorder %s39, 0
          %s741 = scalar_select %p740, %s39, 0
          %s742 = sadd.s32 %s741, %s739
          %s743 = smul.addr %s742, 4
          %s744 = scalar_lea.vmem %s6, %s743
        $region84: #{tpu_custom_call.1} parent=63 // pred_fallthru
          _
      $region64: #{tpu_custom_call.1} parent=5 // pred_fallthru
        _
    $region6: #{tpu_custom_call.1} parent=1 // loop_footer
      %s29 = sadd.s32 1, %s25
    $region7: #{tpu_custom_call.1} parent=1 // loop_footer_branch
      %24 = sbr.rel target = $region3
    $region8: #{tpu_custom_call.1} parent=1 // loop_exit
      _
    %745 = vsyncpa [#allocation3], 1
    %s746 = scalar_lea.sflag [#allocation3], 1
    %747 = vsyncpa %s746, 1
    %748 = vsyncpa [#allocation6], 1
    %s749 = scalar_lea.sflag [#allocation6], 1
    %750 = vsyncpa %s749, 1
    %751 = vsyncpa [#allocation4], 1
    %s752 = scalar_lea.sflag [#allocation4], 1
    %753 = vsyncpa %s752, 1
    %754 = vsyncpa [#allocation9], 1
    %s755 = scalar_lea.sflag [#allocation9], 1
    %756 = vsyncpa %s755, 1

</llo_original>
